<compile_context>
chip_gen: v7x
topology: tpu7x:2x2x1
jax: 0.10.0
libtpu: 0.0.40
codegen_flags: <defaults>
</compile_context>

<pallas_src>
import functools

import jax
import jax.numpy as jnp
from jax import lax
from jax.experimental import pallas as pl
from jax.experimental.pallas import tpu as pltpu

_LANE = 128


def _vmem_budget_and_cap():
    """(tile budget, scoped-VMEM cap) derived from this generation's VMEM."""
    try:
        cap = int(pltpu.get_tpu_info().vmem_capacity_bytes)
    except Exception:  # not queryable: assume the smallest (v7x, 64 MiB / TC)
        cap = 64 * 1024 * 1024
    cap = max(cap, 32 * 1024 * 1024)
    # ~22 MiB budget / 48 MiB cap on v7x; ~45 MiB / 96 MiB on v5e/v6e.
    return int(0.35 * cap), int(0.75 * cap)


def _choose_tile_h(C, H, Wp, itemsize, out_c, budget):
    """Largest TH (multiple of 8, dividing H) whose double-buffered input,
    halo and output blocks plus live f32 temporaries fit the VMEM budget."""
    if H % 8 != 0:
        return H                                   # single full-height slab
    best = 8
    for th in range(8, H + 1, 8):
        if H % th:
            continue
        live = (2 * C * th * Wp * itemsize         # input slab (double-buffered)
                + 2 * C * 8 * Wp * itemsize        # halo strip (double-buffered)
                + 2 * out_c * th * Wp * itemsize   # 'none'-path output block
                + 8 * th * Wp * 4)                 # live f32 temporaries
        if live <= budget:
            best = th
    return best


def _channel_grad_sq(x_ref, nxt_ref, is_last, *, TH, Wp, W_real):
    """Yield (c, dx**2 + dy**2) in f32 for each channel of the current slab.

    x_ref:   (1, C, TH, Wp) block of the (lane-padded) input.
    nxt_ref: (1, C, SH, Wp) halo strip; only its first row is used.
    is_last: scalar bool — this is the image's last H-slab.
    Boundary diffs (last real row / column, lane padding) are exactly 0.
    """
    C = x_ref.shape[1]
    col = lax.broadcasted_iota(jnp.int32, (TH, Wp), 1)
    row = lax.broadcasted_iota(jnp.int32, (TH, Wp), 0)
    dx_mask = col < W_real - 1          # last real column + lane padding -> 0
    last_row = row == TH - 1
    for c in range(C):
        xc = x_ref[0, c]                                   # (TH, Wp)
        # Halo row below this slab.  On the last slab use the slab's own last
        # row so dy there is exactly 0 (replicate padding); this replaces the
        # old per-element `global_row < H-1` select on the full block.
        halo = jnp.where(is_last, xc[TH - 1:TH, :], nxt_ref[0, c, 0:1, :])
        right = pltpu.roll(xc, shift=Wp - 1, axis=1)       # xc[:, w+1] (wraps)
        down = pltpu.roll(xc, shift=TH - 1, axis=0)        # xc[r+1, :] (wraps)
        down = jnp.where(last_row, halo, down)
        dx = jnp.where(dx_mask, (xc - right).astype(jnp.float32), 0.0)
        dy = (xc - down).astype(jnp.float32)
        yield c, dx * dx + dy * dy


def _tv_reduce_kernel(x_ref, nxt_ref, acc_ref, *, p, eps, n_h, per_shard, TH,
                      W_real, acc_rows):
    h = pl.program_id(2)
    g = pl.program_id(1) * per_shard + h           # global H-slab index

    @pl.when(h == 0)
    def _():
        acc_ref[...] = jnp.zeros_like(acc_ref)

    C = x_ref.shape[1]
    Wp = x_ref.shape[3]
    msum = jnp.zeros((TH, Wp), jnp.float32)
    # TODO(synk): for C >= 64 the channel reduction could be moved to the idle
    # MXU (ones(1, C) @ dsq) to relieve the VALU slot on v7x.
    for _, dsq in _channel_grad_sq(x_ref, nxt_ref, g == n_h - 1,
                                   TH=TH, Wp=Wp, W_real=W_real):
        msum = msum + dsq

    if p == 1:
        s = msum * (1.0 / C) + eps
        m = s * lax.rsqrt(s)                       # sqrt via the (free) EUP slot
        if Wp != W_real:                           # zero sqrt(eps) in lane padding
            col = lax.broadcasted_iota(jnp.int32, (TH, Wp), 1)
            m = jnp.where(col < W_real, m, 0.0)
    else:
        m = msum                                   # p == 2: padding is already 0

    # Fold sublane blocks into the resident accumulator with a log-depth tree;
    # the final tiny cross-lane reduction happens outside the kernel.
    if acc_rows == 8:
        part = m.reshape(TH // 8, 8, Wp).sum(axis=0)
    else:
        part = jnp.sum(m, axis=0, keepdims=True)
    acc_ref[...] += part[None, None]


def _tv_none_kernel(x_ref, nxt_ref, o_ref, *, p, eps, n_h, TH, W_real):
    g = pl.program_id(1)
    C = x_ref.shape[1]
    Wp = x_ref.shape[3]
    if p == 1:
        msum = jnp.zeros((TH, Wp), jnp.float32)
        for _, dsq in _channel_grad_sq(x_ref, nxt_ref, g == n_h - 1,
                                       TH=TH, Wp=Wp, W_real=W_real):
            msum = msum + dsq
        s = msum * (1.0 / C) + eps
        o_ref[0, 0] = (s * lax.rsqrt(s)).astype(o_ref.dtype)
    else:
        for c, dsq in _channel_grad_sq(x_ref, nxt_ref, g == n_h - 1,
                                       TH=TH, Wp=Wp, W_real=W_real):
            o_ref[0, c] = dsq.astype(o_ref.dtype)


def tv_loss(x, p=1, reduction="mean", eps=1e-8, tile_h=None):
    if p not in (1, 2):
        raise ValueError("p must be 1 or 2")
    if reduction not in ("mean", "sum", "none"):
        raise ValueError("reduction must be 'mean', 'sum', or 'none'")
    N, C, H, W = x.shape
    itemsize = x.dtype.itemsize

    # Lane-dense W: pad to a multiple of 128 (with zeros) so DMAs and 'none'
    # output stores are unmasked; pad columns contribute exactly 0 to the loss.
    Wp = -(-W // _LANE) * _LANE
    x_in = jnp.pad(x, ((0, 0), (0, 0), (0, 0), (0, Wp - W))) if Wp != W else x

    out_c = (1 if p == 1 else C) if reduction == "none" else 0
    budget, limit_cap = _vmem_budget_and_cap()
    TH = (_choose_tile_h(C, H, Wp, itemsize, out_c, budget)
          if tile_h is None else int(tile_h))
    if H % TH != 0 or not (TH % 8 == 0 or TH == H):
        raise ValueError("tile_h must divide H and be a multiple of 8 (or == H)")
    n_h = H // TH
    SH = 8 if (H % 8 == 0 and TH % 8 == 0) else H       # halo-strip height
    strip_step = TH // SH                               # halo strips per slab

    est = (2 * C * (TH + SH) * Wp * itemsize            # input + halo, 2-buffered
           + 2 * out_c * TH * Wp * itemsize             # 'none' output, 2-buffered
           + 8 * TH * Wp * 4)                           # live f32 temporaries
    vmem_limit = int(min(max(2 * est, 32 * 1024 * 1024), limit_cap))
    # TODO(synk): if a huge C ever forces a tiny TH, pipeline_mode=pl.Buffered(3)
    # on x_spec would hide the exposed DMA latency.

    if reduction == "none":
        x_spec = pl.BlockSpec((1, C, TH, Wp), lambda n, h: (n, 0, h, 0))
        nxt_spec = pl.BlockSpec(
            (1, C, SH, Wp),
            lambda n, h: (n, 0, jnp.minimum(h + 1, n_h - 1) * strip_step, 0))
        kernel = functools.partial(_tv_none_kernel, p=p, eps=eps, n_h=n_h,
                                   TH=TH, W_real=W)
        out = pl.pallas_call(
            kernel,
            out_shape=jax.ShapeDtypeStruct((N, out_c, H, Wp), x.dtype),
            grid=(N, n_h),
            in_specs=[x_spec, nxt_spec],
            out_specs=pl.BlockSpec((1, out_c, TH, Wp), lambda n, h: (n, 0, h, 0)),
            compiler_params=pltpu.CompilerParams(
                dimension_semantics=("parallel", "parallel"),
                vmem_limit_bytes=vmem_limit),
        )(x_in, x_in)
        return out[..., :W] if Wp != W else out

    # Reduce path ('mean'/'sum'): split the H-slab axis into NS 'parallel'
    # shards, each with its own resident accumulator, so both v7x TensorCores
    # get work even when N == 1.
    NS = 2 if (n_h % 2 == 0 and n_h >= 2) else 1
    per_shard = n_h // NS
    acc_rows = 8 if TH % 8 == 0 else 1

    x_spec = pl.BlockSpec((1, C, TH, Wp),
                          lambda n, s, h: (n, 0, s * per_shard + h, 0))
    nxt_spec = pl.BlockSpec(
        (1, C, SH, Wp),
        lambda n, s, h: (n, 0,
                         jnp.minimum(s * per_shard + h + 1, n_h - 1) * strip_step,
                         0))
    kernel = functools.partial(_tv_reduce_kernel, p=p, eps=eps, n_h=n_h,
                               per_shard=per_shard, TH=TH, W_real=W,
                               acc_rows=acc_rows)
    partials = pl.pallas_call(
        kernel,
        out_shape=jax.ShapeDtypeStruct((N, NS, acc_rows, Wp), jnp.float32),
        grid=(N, NS, per_shard),
        in_specs=[x_spec, nxt_spec],
        out_specs=pl.BlockSpec((1, 1, acc_rows, Wp), lambda n, s, h: (n, s, 0, 0)),
        compiler_params=pltpu.CompilerParams(
            dimension_semantics=("parallel", "parallel", "arbitrary"),
            vmem_limit_bytes=vmem_limit),
    )(x_in, x_in)

    total = jnp.sum(partials)            # tiny (N, NS, acc_rows, Wp) reduction in XLA
    if reduction == "sum":
        return total.astype(x.dtype)
    count = N * H * W if p == 1 else N * C * H * W       # elements of `diff`
    return (total / count).astype(x.dtype)


def _tv_loss_ref(x, p, reduction, eps=1e-8):
    """Pure-JAX reference matching the PyTorch forward exactly."""
    xp = jnp.pad(x, ((0, 0), (0, 0), (0, 1), (0, 1)), mode="edge")
    x_diff = xp[..., :-1, :-1] - xp[..., :-1, 1:]
    y_diff = xp[..., :-1, :-1] - xp[..., 1:, :-1]
    diff = x_diff ** 2 + y_diff ** 2
    if p == 1:
        diff = jnp.sqrt(jnp.mean(diff + eps, axis=1, keepdims=True))
    if reduction == "mean":
        return diff.mean()
    if reduction == "sum":
        return diff.sum()
    return diff


if __name__ == "__main__":
    key = jax.random.PRNGKey(0)
    k1, k2 = jax.random.split(key)
    x = jax.random.normal(k1, (2, 4, 16, 16), dtype=jnp.float32)
    x_wide = jax.random.normal(k2, (1, 3, 8, 128), dtype=jnp.float32)

    ok = True
    cases = [
        (x, 1, "mean", None), (x, 2, "mean", None),
        (x, 1, "sum", None), (x, 2, "sum", None),
        (x, 1, "none", None), (x, 2, "none", None),
        (x, 1, "mean", 8), (x, 2, "sum", 8),    # tile_h=8: halo + 2-shard reduce
        (x, 1, "none", 8), (x, 2, "none", 8),   # tile_h=8: halo in the 'none' path
        (x_wide, 1, "mean", None), (x_wide, 2, "none", None),  # lane-aligned W
    ]
    for inp, p, red, th in cases:
        out = jax.block_until_ready(tv_loss(inp, p=p, reduction=red, tile_h=th))
        ref = jax.block_until_ready(_tv_loss_ref(inp, p, red))
        if out.shape != ref.shape:
            ok = False
            print(f"SHAPE MISMATCH p={p} reduction={red} tile_h={th}: "
                  f"{out.shape} vs {ref.shape}")
            continue
        if not jnp.allclose(out, ref, atol=2e-5, rtol=2e-5):
            ok = False
            print(f"MISMATCH p={p} reduction={red} tile_h={th}: "
                  f"max_err={jnp.max(jnp.abs(out - ref))}")
    if ok:
        print("KERNEL_OK")
</pallas_src>

<mosaic_0001>
module attributes {stable_mosaic.version = 11 : i64} {
  func.func @_tv_reduce_kernel(%arg0: i32, %arg1: i32, %arg2: i32, %arg3: memref<1x4x16x128xf32, #tpu.memory_space<vmem>>, %arg4: memref<1x4x8x128xf32, #tpu.memory_space<vmem>>, %arg5: memref<1x1x8x128xf32, #tpu.memory_space<vmem>>) attributes {dimension_semantics = [#tpu.dimension_semantics<parallel>, #tpu.dimension_semantics<parallel>, #tpu.dimension_semantics<arbitrary>], iteration_bounds = array<i64: 2, 1, 1>, scalar_prefetch = 0 : i64, scratch_operands = 0 : i64, tpu.core_type = #tpu.core_type<tc>, window_params = [{transform_indices = @transform_0, window_bounds = array<i64: 1, 4, 16, 128>}, {transform_indices = @transform_1, window_bounds = array<i64: 1, 4, 8, 128>}, {transform_indices = @transform_2, window_bounds = array<i64: 1, 1, 8, 128>}]} {
    %c1_i32 = arith.constant 1 : i32
    %0 = arith.muli %arg1, %c1_i32 : i32
    %1 = arith.addi %0, %arg2 : i32
    %c0_i32 = arith.constant 0 : i32
    %2 = arith.cmpi eq, %arg2, %c0_i32 : i32
    %3 = arith.extui %2 : i1 to i32
    %c0_i32_0 = arith.constant 0 : i32
    %4 = arith.cmpi ne, %3, %c0_i32_0 : i32
    scf.if %4 {
      %cst_54 = arith.constant 0.000000e+00 : f32
      %106 = vector.broadcast %cst_54 : f32 to vector<1x1x8x128xf32>
      %c0_55 = arith.constant 0 : index
      %c0_56 = arith.constant 0 : index
      %c0_57 = arith.constant 0 : index
      %c0_58 = arith.constant 0 : index
      %107 = vector.load %arg5[%c0_55, %c0_56, %c0_57, %c0_58] : memref<1x1x8x128xf32, #tpu.memory_space<vmem>>, vector<1x1x8x128xf32>
      tpu.vector_store %arg5[%c0_55, %c0_56, %c0_57, %c0_58], %106 {strides = array<i32>} : memref<1x1x8x128xf32, #tpu.memory_space<vmem>>, vector<1x1x8x128xf32>,
    } else {
    }
    %cst = arith.constant 0.000000e+00 : f32
    %5 = vector.broadcast %cst : f32 to vector<16x128xf32>
    %c0_i32_1 = arith.constant 0 : i32
    %6 = arith.cmpi eq, %1, %c0_i32_1 : i32
    %7 = tpu.iota {dimensions = array<i32: 1>} : vector<16x128xi32>
    %8 = tpu.iota {dimensions = array<i32: 0>} : vector<16x128xi32>
    %c15_i32 = arith.constant 15 : i32
    %9 = vector.broadcast %c15_i32 : i32 to vector<16x128xi32>
    %10 = arith.cmpi slt, %7, %9 : vector<16x128xi32>
    %c15_i32_2 = arith.constant 15 : i32
    %11 = vector.broadcast %c15_i32_2 : i32 to vector<16x128xi32>
    %12 = arith.cmpi eq, %8, %11 : vector<16x128xi32>
    %c0 = arith.constant 0 : index
    %c0_3 = arith.constant 0 : index
    %c0_4 = arith.constant 0 : index
    %c0_5 = arith.constant 0 : index
    %13 = vector.load %arg3[%c0, %c0_3, %c0_4, %c0_5] : memref<1x4x16x128xf32, #tpu.memory_space<vmem>>, vector<1x1x16x128xf32>
    %14 = vector.shape_cast %13 : vector<1x1x16x128xf32> to vector<16x128xf32>
    %15 = vector.extract_strided_slice %14 {offsets = [15, 0], sizes = [1, 128], strides = [1, 1]} : vector<16x128xf32> to vector<1x128xf32>
    %c0_6 = arith.constant 0 : index
    %c0_7 = arith.constant 0 : index
    %c0_8 = arith.constant 0 : index
    %c0_9 = arith.constant 0 : index
    %16 = vector.load %arg4[%c0_6, %c0_7, %c0_8, %c0_9] : memref<1x4x8x128xf32, #tpu.memory_space<vmem>>, vector<1x1x1x128xf32>
    %17 = vector.shape_cast %16 : vector<1x1x1x128xf32> to vector<1x128xf32>
    %18 = arith.select %6, %15, %17 : vector<1x128xf32>
    %c127_i32 = arith.constant 127 : i32
    %19 = tpu.dynamic_rotate %14 by %c127_i32 dim 1 : vector<16x128xf32>, i32 -> vector<16x128xf32>
    %c15_i32_10 = arith.constant 15 : i32
    %20 = tpu.dynamic_rotate %14 by %c15_i32_10 dim 0 : vector<16x128xf32>, i32 -> vector<16x128xf32>
    %21 = vector.shape_cast %18 : vector<1x128xf32> to vector<1x128xf32>
    %22 = vector.broadcast %21 : vector<1x128xf32> to vector<16x128xf32>
    %23 = arith.select %12, %22, %20 : vector<16x128xi1>, vector<16x128xf32>
    %24 = arith.subf %14, %19 : vector<16x128xf32>
    %cst_11 = arith.constant 0.000000e+00 : f32
    %25 = vector.broadcast %cst_11 : f32 to vector<16x128xf32>
    %26 = arith.select %10, %24, %25 : vector<16x128xi1>, vector<16x128xf32>
    %27 = arith.subf %14, %23 : vector<16x128xf32>
    %28 = arith.mulf %26, %26 : vector<16x128xf32>
    %29 = arith.mulf %27, %27 : vector<16x128xf32>
    %30 = arith.addf %28, %29 : vector<16x128xf32>
    %31 = arith.addf %5, %30 : vector<16x128xf32>
    %c0_12 = arith.constant 0 : index
    %c1 = arith.constant 1 : index
    %c0_13 = arith.constant 0 : index
    %c0_14 = arith.constant 0 : index
    %32 = vector.load %arg3[%c0_12, %c1, %c0_13, %c0_14] : memref<1x4x16x128xf32, #tpu.memory_space<vmem>>, vector<1x1x16x128xf32>
    %33 = vector.shape_cast %32 : vector<1x1x16x128xf32> to vector<16x128xf32>
    %34 = vector.extract_strided_slice %33 {offsets = [15, 0], sizes = [1, 128], strides = [1, 1]} : vector<16x128xf32> to vector<1x128xf32>
    %c0_15 = arith.constant 0 : index
    %c1_16 = arith.constant 1 : index
    %c0_17 = arith.constant 0 : index
    %c0_18 = arith.constant 0 : index
    %35 = vector.load %arg4[%c0_15, %c1_16, %c0_17, %c0_18] : memref<1x4x8x128xf32, #tpu.memory_space<vmem>>, vector<1x1x1x128xf32>
    %36 = vector.shape_cast %35 : vector<1x1x1x128xf32> to vector<1x128xf32>
    %37 = arith.select %6, %34, %36 : vector<1x128xf32>
    %c127_i32_19 = arith.constant 127 : i32
    %38 = tpu.dynamic_rotate %33 by %c127_i32_19 dim 1 : vector<16x128xf32>, i32 -> vector<16x128xf32>
    %c15_i32_20 = arith.constant 15 : i32
    %39 = tpu.dynamic_rotate %33 by %c15_i32_20 dim 0 : vector<16x128xf32>, i32 -> vector<16x128xf32>
    %40 = vector.shape_cast %37 : vector<1x128xf32> to vector<1x128xf32>
    %41 = vector.broadcast %40 : vector<1x128xf32> to vector<16x128xf32>
    %42 = arith.select %12, %41, %39 : vector<16x128xi1>, vector<16x128xf32>
    %43 = arith.subf %33, %38 : vector<16x128xf32>
    %cst_21 = arith.constant 0.000000e+00 : f32
    %44 = vector.broadcast %cst_21 : f32 to vector<16x128xf32>
    %45 = arith.select %10, %43, %44 : vector<16x128xi1>, vector<16x128xf32>
    %46 = arith.subf %33, %42 : vector<16x128xf32>
    %47 = arith.mulf %45, %45 : vector<16x128xf32>
    %48 = arith.mulf %46, %46 : vector<16x128xf32>
    %49 = arith.addf %47, %48 : vector<16x128xf32>
    %50 = arith.addf %31, %49 : vector<16x128xf32>
    %c0_22 = arith.constant 0 : index
    %c2 = arith.constant 2 : index
    %c0_23 = arith.constant 0 : index
    %c0_24 = arith.constant 0 : index
    %51 = vector.load %arg3[%c0_22, %c2, %c0_23, %c0_24] : memref<1x4x16x128xf32, #tpu.memory_space<vmem>>, vector<1x1x16x128xf32>
    %52 = vector.shape_cast %51 : vector<1x1x16x128xf32> to vector<16x128xf32>
    %53 = vector.extract_strided_slice %52 {offsets = [15, 0], sizes = [1, 128], strides = [1, 1]} : vector<16x128xf32> to vector<1x128xf32>
    %c0_25 = arith.constant 0 : index
    %c2_26 = arith.constant 2 : index
    %c0_27 = arith.constant 0 : index
    %c0_28 = arith.constant 0 : index
    %54 = vector.load %arg4[%c0_25, %c2_26, %c0_27, %c0_28] : memref<1x4x8x128xf32, #tpu.memory_space<vmem>>, vector<1x1x1x128xf32>
    %55 = vector.shape_cast %54 : vector<1x1x1x128xf32> to vector<1x128xf32>
    %56 = arith.select %6, %53, %55 : vector<1x128xf32>
    %c127_i32_29 = arith.constant 127 : i32
    %57 = tpu.dynamic_rotate %52 by %c127_i32_29 dim 1 : vector<16x128xf32>, i32 -> vector<16x128xf32>
    %c15_i32_30 = arith.constant 15 : i32
    %58 = tpu.dynamic_rotate %52 by %c15_i32_30 dim 0 : vector<16x128xf32>, i32 -> vector<16x128xf32>
    %59 = vector.shape_cast %56 : vector<1x128xf32> to vector<1x128xf32>
    %60 = vector.broadcast %59 : vector<1x128xf32> to vector<16x128xf32>
    %61 = arith.select %12, %60, %58 : vector<16x128xi1>, vector<16x128xf32>
    %62 = arith.subf %52, %57 : vector<16x128xf32>
    %cst_31 = arith.constant 0.000000e+00 : f32
    %63 = vector.broadcast %cst_31 : f32 to vector<16x128xf32>
    %64 = arith.select %10, %62, %63 : vector<16x128xi1>, vector<16x128xf32>
    %65 = arith.subf %52, %61 : vector<16x128xf32>
    %66 = arith.mulf %64, %64 : vector<16x128xf32>
    %67 = arith.mulf %65, %65 : vector<16x128xf32>
    %68 = arith.addf %66, %67 : vector<16x128xf32>
    %69 = arith.addf %50, %68 : vector<16x128xf32>
    %c0_32 = arith.constant 0 : index
    %c3 = arith.constant 3 : index
    %c0_33 = arith.constant 0 : index
    %c0_34 = arith.constant 0 : index
    %70 = vector.load %arg3[%c0_32, %c3, %c0_33, %c0_34] : memref<1x4x16x128xf32, #tpu.memory_space<vmem>>, vector<1x1x16x128xf32>
    %71 = vector.shape_cast %70 : vector<1x1x16x128xf32> to vector<16x128xf32>
    %72 = vector.extract_strided_slice %71 {offsets = [15, 0], sizes = [1, 128], strides = [1, 1]} : vector<16x128xf32> to vector<1x128xf32>
    %c0_35 = arith.constant 0 : index
    %c3_36 = arith.constant 3 : index
    %c0_37 = arith.constant 0 : index
    %c0_38 = arith.constant 0 : index
    %73 = vector.load %arg4[%c0_35, %c3_36, %c0_37, %c0_38] : memref<1x4x8x128xf32, #tpu.memory_space<vmem>>, vector<1x1x1x128xf32>
    %74 = vector.shape_cast %73 : vector<1x1x1x128xf32> to vector<1x128xf32>
    %75 = arith.select %6, %72, %74 : vector<1x128xf32>
    %c127_i32_39 = arith.constant 127 : i32
    %76 = tpu.dynamic_rotate %71 by %c127_i32_39 dim 1 : vector<16x128xf32>, i32 -> vector<16x128xf32>
    %c15_i32_40 = arith.constant 15 : i32
    %77 = tpu.dynamic_rotate %71 by %c15_i32_40 dim 0 : vector<16x128xf32>, i32 -> vector<16x128xf32>
    %78 = vector.shape_cast %75 : vector<1x128xf32> to vector<1x128xf32>
    %79 = vector.broadcast %78 : vector<1x128xf32> to vector<16x128xf32>
    %80 = arith.select %12, %79, %77 : vector<16x128xi1>, vector<16x128xf32>
    %81 = arith.subf %71, %76 : vector<16x128xf32>
    %cst_41 = arith.constant 0.000000e+00 : f32
    %82 = vector.broadcast %cst_41 : f32 to vector<16x128xf32>
    %83 = arith.select %10, %81, %82 : vector<16x128xi1>, vector<16x128xf32>
    %84 = arith.subf %71, %80 : vector<16x128xf32>
    %85 = arith.mulf %83, %83 : vector<16x128xf32>
    %86 = arith.mulf %84, %84 : vector<16x128xf32>
    %87 = arith.addf %85, %86 : vector<16x128xf32>
    %88 = arith.addf %69, %87 : vector<16x128xf32>
    %cst_42 = arith.constant 2.500000e-01 : f32
    %89 = vector.broadcast %cst_42 : f32 to vector<16x128xf32>
    %90 = arith.mulf %88, %89 : vector<16x128xf32>
    %cst_43 = arith.constant 9.99999993E-9 : f32
    %91 = vector.broadcast %cst_43 : f32 to vector<16x128xf32>
    %92 = arith.addf %90, %91 : vector<16x128xf32>
    %93 = math.rsqrt %92 : vector<16x128xf32>
    %94 = arith.mulf %92, %93 : vector<16x128xf32>
    %95 = tpu.iota {dimensions = array<i32: 1>} : vector<16x128xi32>
    %c16_i32 = arith.constant 16 : i32
    %96 = vector.broadcast %c16_i32 : i32 to vector<16x128xi32>
    %97 = arith.cmpi slt, %95, %96 : vector<16x128xi32>
    %cst_44 = arith.constant 0.000000e+00 : f32
    %98 = vector.broadcast %cst_44 : f32 to vector<16x128xf32>
    %99 = arith.select %97, %94, %98 : vector<16x128xi1>, vector<16x128xf32>
    %100 = vector.shape_cast %99 : vector<16x128xf32> to vector<2x8x128xf32>
    %cst_45 = arith.constant dense<0.000000e+00> : vector<8x128xf32>
    %101 = vector.multi_reduction <add>, %100, %cst_45 [0] : vector<2x8x128xf32> to vector<8x128xf32>
    %c0_46 = arith.constant 0 : index
    %c0_47 = arith.constant 0 : index
    %c0_48 = arith.constant 0 : index
    %c0_49 = arith.constant 0 : index
    %102 = vector.load %arg5[%c0_46, %c0_47, %c0_48, %c0_49] : memref<1x1x8x128xf32, #tpu.memory_space<vmem>>, vector<1x1x8x128xf32>
    %103 = vector.shape_cast %101 : vector<8x128xf32> to vector<1x1x8x128xf32>
    %104 = arith.addf %102, %103 : vector<1x1x8x128xf32>
    %c0_50 = arith.constant 0 : index
    %c0_51 = arith.constant 0 : index
    %c0_52 = arith.constant 0 : index
    %c0_53 = arith.constant 0 : index
    %105 = vector.load %arg5[%c0_50, %c0_51, %c0_52, %c0_53] : memref<1x1x8x128xf32, #tpu.memory_space<vmem>>, vector<1x1x8x128xf32>
    tpu.vector_store %arg5[%c0_50, %c0_51, %c0_52, %c0_53], %104 {strides = array<i32>} : memref<1x1x8x128xf32, #tpu.memory_space<vmem>>, vector<1x1x8x128xf32>,
    return
  }
  func.func @transform_0(%arg0: i32, %arg1: i32, %arg2: i32) -> (i32, i32, i32, i32) {
    %c1_i32 = arith.constant 1 : i32
    %0 = arith.muli %arg1, %c1_i32 : i32
    %1 = arith.addi %0, %arg2 : i32
    %c0_i32 = arith.constant 0 : i32
    %c0_i32_0 = arith.constant 0 : i32
    %c0_i32_1 = arith.constant 0 : i32
    return %arg0, %c0_i32, %1, %c0_i32_0 : i32, i32, i32, i32
  }
  func.func @transform_1(%arg0: i32, %arg1: i32, %arg2: i32) -> (i32, i32, i32, i32) {
    %c1_i32 = arith.constant 1 : i32
    %0 = arith.muli %arg1, %c1_i32 : i32
    %1 = arith.addi %0, %arg2 : i32
    %c1_i32_0 = arith.constant 1 : i32
    %2 = arith.addi %1, %c1_i32_0 : i32
    %c0_i32 = arith.constant 0 : i32
    %3 = arith.minsi %2, %c0_i32 : i32
    %c2_i32 = arith.constant 2 : i32
    %4 = arith.muli %3, %c2_i32 : i32
    %c0_i32_1 = arith.constant 0 : i32
    %c0_i32_2 = arith.constant 0 : i32
    %c0_i32_3 = arith.constant 0 : i32
    return %arg0, %c0_i32_1, %4, %c0_i32_2 : i32, i32, i32, i32
  }
  func.func @transform_2(%arg0: i32, %arg1: i32, %arg2: i32) -> (i32, i32, i32, i32) {
    %c0_i32 = arith.constant 0 : i32
    %c0_i32_0 = arith.constant 0 : i32
    %c0_i32_1 = arith.constant 0 : i32
    return %arg0, %arg1, %c0_i32, %c0_i32_0 : i32, i32, i32, i32
  }
}

</mosaic_0001>

<llo_original>
// kernel: tpu_custom_call.1
$region0: #{tpu_custom_call.1}
  #allocation0 [shape = 'u32[]', space=smem, size = 0x4, offset = 0x4, fixed_abs, tag = 'smem constant byte address 0x4 - core index']
  #allocation1 [shape = 'u32[144,128]{1,0:T(1,128)}', space=vmem, size = 0x12000, scoped, tag = 'internal scratch']
  %s0 = inlined_call_operand.hbm [shape: f32[2,4,16,128], index: 0, kind: input, shape index: {}]
  %s1 = inlined_call_operand.hbm [shape: f32[2,4,16,128], index: 1, kind: input, shape index: {}]
  %s2 = inlined_call_operand.hbm [shape: f32[2,1,8,128], index: 2, kind: output, shape index: {}]
  %s3 = sld [smem:[#allocation0]]
  $region53: #{tpu_custom_call.1} parent=0
    _
  %s5 = ssub.s32 1, %s3
  %s6 = scalar_select 0, %s5, %s3
  $region1: #{tpu_custom_call.1} parent=0
    #allocation2 [shape = 'u8[65536]{0}', space=vmem, size = 0x10000, scoped, tag = 'input window, operand 0']
    #allocation3 [shape = 's32[2]{0}', space=sflag, size = 0x8, scoped, tag = 'scoped memory for tpu_custom_call.1']
    #allocation4 [shape = 's32[2]{0}', space=sflag, size = 0x8, scoped, tag = 'scoped memory for tpu_custom_call.1']
    #allocation5 [shape = 'u8[32768]{0}', space=vmem, size = 0x8000, scoped, tag = 'input window, operand 1']
    #allocation6 [shape = 's32[2]{0}', space=sflag, size = 0x8, scoped, tag = 'scoped memory for tpu_custom_call.1']
    #allocation7 [shape = 'u8[8192]{0}', space=vmem, size = 0x2000, scoped, tag = 'output window, operand 0']
    %7 = vsyncpa [#allocation3], 0
    %s8 = scalar_lea.sflag [#allocation3], 1
    %9 = vsyncpa %s8, 0
    %10 = vsyncpa [#allocation6], 0
    %s11 = scalar_lea.sflag [#allocation6], 1
    %12 = vsyncpa %s11, 0
    %13 = vsyncpa [#allocation4], 0
    %s14 = scalar_lea.sflag [#allocation4], 1
    %15 = vsyncpa %s14, 0
    loop: start=0, step=1, limit=4
    $region2: #{tpu_custom_call.1} parent=1 // loop_pre_header
      _
    $region3: #{tpu_custom_call.1} parent=1 // loop_header
      %s17 = sphi 0, %s21
      %p18 = scmp.ge.s32.totalorder %s17, 4
      %s24 = sphi 0, %s43
      %s25 = sphi 0, %s39
      %s26 = sphi 0, %s35
      %s27 = sphi 0, %s24
      %s28 = sphi 0, %s25
      %s29 = sphi 0, %s26
      %s30 = sphi 0, %s27
      %s31 = sphi 0, %s28
      %s32 = sphi 0, %s29
      %s50 = sphi 0, %s52
      %s53 = sphi 0, %s50
      %s54 = sphi 0, %s53
      %s70 = sphi 0, %s54
      %s88 = sphi 0, %s90
      %s91 = sphi 0, %s88
      %s92 = sphi 0, %s91
      %s108 = sphi 0, %s92
      %s116 = sphi 0, %s118
      %s119 = sphi 0, %s116
      %s120 = sphi 0, %s119
      %s136 = sphi 0, %s120
    $region4: #{tpu_custom_call.1} parent=1 // loop_header_branch
      %20 = sbr.rel (%p18) target = $region8
    $region5: #{tpu_custom_call.1} parent=1 // loop_body
      %s22 = ssub.s32 %s17, 1
      %s23 = ssub.s32 %s17, 2
      %s33 = sadd.s32 1, %s26
      %p34 = scmp.ge.s32.totalorder %s33, 1
      %s35 = scalar_select %p34, 0, %s33
      %s36 = sadd.s32 1, %s25
      %s37 = scalar_select %p34, %s36, %s25
      %p38 = scmp.ge.s32.totalorder %s37, 1
      %s39 = scalar_select %p38, 0, %s37
      %s40 = sadd.s32 1, %s24
      %s41 = scalar_select %p38, %s40, %s24
      %p42 = scmp.ge.s32.totalorder %s41, 2
      %s43 = scalar_select %p42, 0, %s41
      %s44 = sadd.s32 %s25, %s26
      %s45 = sadd.s32 %s39, %s35
      %s46 = ssub.s32 %s24, %s43
      %s47 = ssub.s32 %s44, %s45
      %s48 = sor.u32 %s46, %s47
      %p49 = scmp.eq.s32.totalorder %s48, 0
      %s51 = sadd.s32 %s50, 1
      %s52 = scalar_select %p49, %s50, %s51
      %p55 = pneg %p49
      %p56 = scmp.eq.s32.totalorder %s17, 1
      %p57 = por %p55, %p56
      %p58 = scmp.ne.s32.totalorder %s50, %s53
      %p59 = scmp.eq.s32.totalorder %s17, 0
      %p60 = por %p58, %p59
      %p61 = scmp.ne.s32.totalorder %s50, %s53
      %p62 = scmp.eq.s32.totalorder %s22, 1
      %p63 = por %p61, %p62
      %p64 = scmp.ne.s32.totalorder %s53, %s54
      %p65 = scmp.eq.s32.totalorder %s22, 0
      %p66 = por %p64, %p65
      %p67 = scmp.ne.s32.totalorder %s53, %s54
      %p68 = scmp.eq.s32.totalorder %s23, 1
      %p69 = por %p67, %p68
      %p71 = scmp.ne.s32.totalorder %s54, %s70
      %p72 = scmp.eq.s32.totalorder %s23, 0
      %p73 = por %p71, %p72
      %s74 = sadd.s32 %s25, %s26
      %s75 = sadd.s32 %s74, 1
      %p76 = scmp.lt.s32.totalorder %s75, 0
      %s77 = scalar_select %p76, %s75, 0
      %s78 = smul.u32 %s77, 2
      %s79 = sadd.s32 %s39, %s35
      %s80 = sadd.s32 %s79, 1
      %p81 = scmp.lt.s32.totalorder %s80, 0
      %s82 = scalar_select %p81, %s80, 0
      %s83 = smul.u32 %s82, 2
      %s84 = ssub.s32 %s24, %s43
      %s85 = ssub.s32 %s78, %s83
      %s86 = sor.u32 %s84, %s85
      %p87 = scmp.eq.s32.totalorder %s86, 0
      %s89 = sadd.s32 %s88, 1
      %s90 = scalar_select %p87, %s88, %s89
      %p93 = pneg %p87
      %p94 = scmp.eq.s32.totalorder %s17, 1
      %p95 = por %p93, %p94
      %p96 = scmp.ne.s32.totalorder %s88, %s91
      %p97 = scmp.eq.s32.totalorder %s17, 0
      %p98 = por %p96, %p97
      %p99 = scmp.ne.s32.totalorder %s88, %s91
      %p100 = scmp.eq.s32.totalorder %s22, 1
      %p101 = por %p99, %p100
      %p102 = scmp.ne.s32.totalorder %s91, %s92
      %p103 = scmp.eq.s32.totalorder %s22, 0
      %p104 = por %p102, %p103
      %p105 = scmp.ne.s32.totalorder %s91, %s92
      %p106 = scmp.eq.s32.totalorder %s23, 1
      %p107 = por %p105, %p106
      %p109 = scmp.ne.s32.totalorder %s92, %s108
      %p110 = scmp.eq.s32.totalorder %s23, 0
      %p111 = por %p109, %p110
      %s112 = ssub.s32 %s24, %s43
      %s113 = ssub.s32 %s25, %s39
      %s114 = sor.u32 %s112, %s113
      %p115 = scmp.eq.s32.totalorder %s114, 0
      %s117 = sadd.s32 %s116, 1
      %s118 = scalar_select %p115, %s116, %s117
      %p121 = pneg %p115
      %p122 = scmp.eq.s32.totalorder %s17, 1
      %p123 = por %p121, %p122
      %p124 = scmp.ne.s32.totalorder %s116, %s119
      %p125 = scmp.eq.s32.totalorder %s17, 0
      %p126 = por %p124, %p125
      %p127 = scmp.ne.s32.totalorder %s116, %s119
      %p128 = scmp.eq.s32.totalorder %s22, 1
      %p129 = por %p127, %p128
      %p130 = scmp.ne.s32.totalorder %s119, %s120
      %p131 = scmp.eq.s32.totalorder %s22, 0
      %p132 = por %p130, %p131
      %p133 = scmp.ne.s32.totalorder %s119, %s120
      %p134 = scmp.eq.s32.totalorder %s23, 1
      %p135 = por %p133, %p134
      %p137 = scmp.ne.s32.totalorder %s120, %s136
      %p138 = scmp.eq.s32.totalorder %s23, 0
      %p139 = por %p137, %p138
      %p140 = scmp.le.s32.totalorder 1, %s17
      %p141 = scmp.lt.s32.totalorder %s17, 3
      %p142 = pnand %p140, %p141
      %p143 = pneg %p142
      // Predicated region
      $region9: #{tpu_custom_call.1} parent=5 // pred_check
        _
      $region10: #{tpu_custom_call.1} parent=5 // pred_check_branch
        %145 = sbr.rel (%p142) target = $region12
      $region11: #{tpu_custom_call.1} parent=5 // pred_region
        %s146 = ssub.s32 %s17, 1
      $region12: #{tpu_custom_call.1} parent=5 // pred_fallthru
        _
      %p147 = scmp.lt.s32.totalorder %s17, 2
      // Predicated region
      $region13: #{tpu_custom_call.1} parent=5 // pred_check
        %p148 = pneg %p147
      $region14: #{tpu_custom_call.1} parent=5 // pred_check_branch
        %150 = sbr.rel (%p148) target = $region16
      $region15: #{tpu_custom_call.1} parent=5 // pred_region
        // Predicated region
        $region17: #{tpu_custom_call.1} parent=15 // pred_check
          %p151 = pneg %p60
        $region18: #{tpu_custom_call.1} parent=15 // pred_check_branch
          %153 = sbr.rel (%p151) target = $region20
        $region19: #{tpu_custom_call.1} parent=15 // pred_region
          %s154 = sand.u32 %s50, 1
          %s155 = scalar_lea.sflag [#allocation3], %s154
          %s156 = sand.u32 %s50, 1
          %s157 = smul.addr %s156, 64
          %s158 = scalar_lea.vmem [#allocation2], %s157
          %s159 = sadd.s32 %s25, %s26
          %s160 = smul.u32 2, %s159
          %s162 = ssub.s32 1024, 1024
          %163 = vsyncadd %s155, %s162
          %s164 = smul.addr %s24, 8
          %s165 = sadd.s32 %s160, %s164
          %s166 = smul.addr %s165, 128
          %s167 = scalar_lea.hbm %s0, %s166
          %s168 = sshll.u32 %s158, 4
          %s169 = int_to_ptr.vmem [resolvable:$true] %s168
          %174 = dma.hbm_to_vmem [thread:$0]  %s167, 1024, %s169, %s155, 128, 128, 8
        $region20: #{tpu_custom_call.1} parent=15 // pred_fallthru
          _
        // Predicated region
        $region21: #{tpu_custom_call.1} parent=15 // pred_check
          %p175 = pneg %p98
        $region22: #{tpu_custom_call.1} parent=15 // pred_check_branch
          %177 = sbr.rel (%p175) target = $region24
        $region23: #{tpu_custom_call.1} parent=15 // pred_region
          %s178 = sand.u32 %s88, 1
          %s179 = scalar_lea.sflag [#allocation6], %s178
          %s180 = sand.u32 %s88, 1
          %s181 = smul.addr %s180, 32
          %s182 = scalar_lea.vmem [#allocation5], %s181
          %s183 = sadd.s32 %s25, %s26
          %s184 = sadd.s32 %s183, 1
          %p185 = scmp.lt.s32.totalorder %s184, 0
          %s186 = scalar_select %p185, %s184, 0
          %s187 = smul.u32 %s186, 2
          %s189 = ssub.s32 512, 512
          %190 = vsyncadd %s179, %s189
          %s191 = smul.addr %s24, 8
          %s192 = sadd.s32 %s187, %s191
          %s193 = smul.addr %s192, 128
          %s194 = scalar_lea.hbm %s1, %s193
          %s195 = sshll.u32 %s182, 4
          %s196 = int_to_ptr.vmem [resolvable:$true] %s195
          %201 = dma.hbm_to_vmem [thread:$0]  %s194, 512, %s196, %s179, 256, 128, 8
        $region24: #{tpu_custom_call.1} parent=15 // pred_fallthru
          _
      $region16: #{tpu_custom_call.1} parent=5 // pred_fallthru
        _
      %p202 = scmp.le.s32.totalorder 1, %s17
      %p203 = scmp.lt.s32.totalorder %s17, 3
      %p204 = pnand %p202, %p203
      %p205 = pneg %p204
      // Predicated region
      $region25: #{tpu_custom_call.1} parent=5 // pred_check
        _
      $region26: #{tpu_custom_call.1} parent=5 // pred_check_branch
        %207 = sbr.rel (%p204) target = $region28
      $region27: #{tpu_custom_call.1} parent=5 // pred_region
        %s208 = ssub.s32 %s17, 1
        %s209 = sand.u32 %s53, 1
        %s210 = scalar_lea.sflag [#allocation3], %s209
        %s211 = sand.u32 %s53, 1
        %s212 = smul.addr %s211, 64
        %s213 = scalar_lea.vmem [#allocation2], %s212
        // Predicated region
        $region29: #{tpu_custom_call.1} parent=27 // pred_check
          %p214 = pneg %p66
        $region30: #{tpu_custom_call.1} parent=27 // pred_check_branch
          %216 = sbr.rel (%p214) target = $region32
        $region31: #{tpu_custom_call.1} parent=27 // pred_region
          %217 = dma.done %s210, 1024
        $region32: #{tpu_custom_call.1} parent=27 // pred_fallthru
          _
        %s218 = sand.u32 %s91, 1
        %s219 = scalar_lea.sflag [#allocation6], %s218
        %s220 = sand.u32 %s91, 1
        %s221 = smul.addr %s220, 32
        %s222 = scalar_lea.vmem [#allocation5], %s221
        // Predicated region
        $region33: #{tpu_custom_call.1} parent=27 // pred_check
          %p223 = pneg %p104
        $region34: #{tpu_custom_call.1} parent=27 // pred_check_branch
          %225 = sbr.rel (%p223) target = $region36
        $region35: #{tpu_custom_call.1} parent=27 // pred_region
          %226 = dma.done %s219, 512
        $region36: #{tpu_custom_call.1} parent=27 // pred_fallthru
          _
        %s227 = sand.u32 %s53, 1
        %s228 = scalar_lea.sflag [#allocation3], %s227
        %s229 = sand.u32 %s53, 1
        %s230 = smul.addr %s229, 64
        %s231 = scalar_lea.vmem [#allocation2], %s230
        %p232 = pneg %p66
        %p233 = pneg %p63
        %s234 = sand.u32 %s91, 1
        %s235 = scalar_lea.sflag [#allocation6], %s234
        %s236 = sand.u32 %s91, 1
        %s237 = smul.addr %s236, 32
        %s238 = scalar_lea.vmem [#allocation5], %s237
        %p239 = pneg %p104
        %p240 = pneg %p101
        %p241 = pneg %p132
        %p242 = pneg %p129
        %s243 = sand.u32 %s119, 1
        %s244 = scalar_lea.sflag [#allocation4], %s243
        %s245 = sand.u32 %s119, 1
        %s246 = smul.addr %s245, 8
        %s247 = scalar_lea.vmem [#allocation7], %s246
        %s248 = sadd.s32 %s28, %s29
        %s249 = smul.u32 2, %s248
        %s250 = sadd.s32 %s28, %s29
        %s251 = sadd.s32 %s250, 1
        %p252 = scmp.lt.s32.totalorder %s251, 0
        %s253 = scalar_select %p252, %s251, 0
        %s254 = smul.u32 %s253, 2
        %s255 = sadd.s32 %s28, %s29
        %p256 = scmp.eq.s32.totalorder %s29, 0
        // Predicated region
        $region37: #{tpu_custom_call.1} parent=27 // pred_check
          %p257 = pneg %p256
        $region38: #{tpu_custom_call.1} parent=27 // pred_check_branch
          %259 = sbr.rel (%p257) target = $region40
        $region39: #{tpu_custom_call.1} parent=27 // pred_region
          %260 = vst [vmem:[%s247] sm:$0xff] 0.0
        $region40: #{tpu_custom_call.1} parent=27 // pred_fallthru
          _
        %p261 = scmp.eq.s32.totalorder %s255, 0
        %v262 = vlaneseq
        %v263 = vand.u32 %v262, 127
        %v264 = vlaneseq
        %v265 = vshrl.u32 %v264, 7
        %v266 = vadd.s32 %v265, 8
        %vm267 = vcmp.lt.s32.totalorder %v263, 15
        %vm268 = vcmp.eq.s32.totalorder %v265, 15
        %vm269 = vcmp.eq.s32.totalorder %v266, 15
        %v270 = vld [vmem:[%s213] sm:$0xff]
        %v271 = vld [vmem:[%s213 + $0x8] sm:$0xff]
        %v272 = vld [vmem:[%s222] sm:$0x1]
        %s273 = scalar_select %p261, 1, 0
        %v274 = vstv %s273
        %vm275 = vcmp.eq.s32.totalorder %v274, 1
        %v277 = vrot.slane %v272, 1
        %v279 = vsel %vm275, %v271, %v277
        %280 = vrot.lane.b32.xlu0 %v270, 127
        %v281 = vpop.permute.xlu0 %280
        %282 = vrot.lane.b32.xlu0 %v271, 127
        %v283 = vpop.permute.xlu0 %282
        %v284 = vrot.slane %v270, 1
        %v285 = vrot.slane %v271, 1
        %vm286 = vcmp.lt.s32.totalorder %v265, 7
        %v287 = vsel %vm286, %v284, %v285
        %v288 = vsel %vm286, %v285, %v284
        %v289 = vlaneseq
        %v290 = vshrl.u32 %v289, 7
        %v291 = vsub.s32 7, %v290
        %v292 = vrot.slane %v279, %v291
        %v293 = vsel %vm268, %v292, %v287
        %v294 = vsel %vm269, %v292, %v288
        %v295 = vsub.f32 %v270, %v281
        %v296 = vsub.f32 %v271, %v283
        %v297 = vsel %vm267, %v295, 0.0
        %v298 = vsel %vm267, %v296, 0.0
        %v299 = vsub.f32 %v270, %v293
        %v300 = vsub.f32 %v271, %v294
        %v301 = vmul.f32 %v297, %v297
        %v302 = vmul.f32 %v298, %v298
        %v303 = vmul.f32 %v299, %v299
        %v304 = vmul.f32 %v300, %v300
        %v305 = vadd.f32 %v301, %v303
        %v306 = vadd.f32 %v302, %v304
        %v307 = vadd.f32 %v305, 0.0
        %v308 = vadd.f32 %v306, 0.0
        %s309 = scalar_lea.vmem %s213, 16 [#allocation2]
        %v310 = vld [vmem:[%s309] sm:$0xff]
        %v311 = vld [vmem:[%s309 + $0x8] sm:$0xff]
        %s312 = scalar_lea.vmem %s222, 8 [#allocation5]
        %v313 = vld [vmem:[%s312] sm:$0x1]
        %v315 = vrot.slane %v313, 1
        %v317 = vsel %vm275, %v311, %v315
        %318 = vrot.lane.b32.xlu0 %v310, 127
        %v319 = vpop.permute.xlu0 %318
        %320 = vrot.lane.b32.xlu0 %v311, 127
        %v321 = vpop.permute.xlu0 %320
        %v322 = vrot.slane %v310, 1
        %v323 = vrot.slane %v311, 1
        %v324 = vsel %vm286, %v322, %v323
        %v325 = vsel %vm286, %v323, %v322
        %v326 = vlaneseq
        %v327 = vshrl.u32 %v326, 7
        %v328 = vsub.s32 7, %v327
        %v329 = vrot.slane %v317, %v328
        %v330 = vsel %vm268, %v329, %v324
        %v331 = vsel %vm269, %v329, %v325
        %v332 = vsub.f32 %v310, %v319
        %v333 = vsub.f32 %v311, %v321
        %v334 = vsel %vm267, %v332, 0.0
        %v335 = vsel %vm267, %v333, 0.0
        %v336 = vsub.f32 %v310, %v330
        %v337 = vsub.f32 %v311, %v331
        %v338 = vmul.f32 %v334, %v334
        %v339 = vmul.f32 %v335, %v335
        %v340 = vmul.f32 %v336, %v336
        %v341 = vmul.f32 %v337, %v337
        %v342 = vadd.f32 %v338, %v340
        %v343 = vadd.f32 %v339, %v341
        %v344 = vadd.f32 %v307, %v342
        %v345 = vadd.f32 %v308, %v343
        %s346 = scalar_lea.vmem %s213, 32 [#allocation2]
        %v347 = vld [vmem:[%s346] sm:$0xff]
        %v348 = vld [vmem:[%s346 + $0x8] sm:$0xff]
        %s349 = scalar_lea.vmem %s222, 16 [#allocation5]
        %v350 = vld [vmem:[%s349] sm:$0x1]
        %v352 = vrot.slane %v350, 1
        %v354 = vsel %vm275, %v348, %v352
        %355 = vrot.lane.b32.xlu0 %v347, 127
        %v356 = vpop.permute.xlu0 %355
        %357 = vrot.lane.b32.xlu0 %v348, 127
        %v358 = vpop.permute.xlu0 %357
        %v359 = vrot.slane %v347, 1
        %v360 = vrot.slane %v348, 1
        %v361 = vsel %vm286, %v359, %v360
        %v362 = vsel %vm286, %v360, %v359
        %v363 = vlaneseq
        %v364 = vshrl.u32 %v363, 7
        %v365 = vsub.s32 7, %v364
        %v366 = vrot.slane %v354, %v365
        %v367 = vsel %vm268, %v366, %v361
        %v368 = vsel %vm269, %v366, %v362
        %v369 = vsub.f32 %v347, %v356
        %v370 = vsub.f32 %v348, %v358
        %v371 = vsel %vm267, %v369, 0.0
        %v372 = vsel %vm267, %v370, 0.0
        %v373 = vsub.f32 %v347, %v367
        %v374 = vsub.f32 %v348, %v368
        %v375 = vmul.f32 %v371, %v371
        %v376 = vmul.f32 %v372, %v372
        %v377 = vmul.f32 %v373, %v373
        %v378 = vmul.f32 %v374, %v374
        %v379 = vadd.f32 %v375, %v377
        %v380 = vadd.f32 %v376, %v378
        %v381 = vadd.f32 %v344, %v379
        %v382 = vadd.f32 %v345, %v380
        %s383 = scalar_lea.vmem %s213, 48 [#allocation2]
        %v384 = vld [vmem:[%s383] sm:$0xff]
        %v385 = vld [vmem:[%s383 + $0x8] sm:$0xff]
        %s386 = scalar_lea.vmem %s222, 24 [#allocation5]
        %v387 = vld [vmem:[%s386] sm:$0x1]
        %v389 = vrot.slane %v387, 1
        %v391 = vsel %vm275, %v385, %v389
        %392 = vrot.lane.b32.xlu0 %v384, 127
        %v393 = vpop.permute.xlu0 %392
        %394 = vrot.lane.b32.xlu0 %v385, 127
        %v395 = vpop.permute.xlu0 %394
        %v396 = vrot.slane %v384, 1
        %v397 = vrot.slane %v385, 1
        %v398 = vsel %vm286, %v396, %v397
        %v399 = vsel %vm286, %v397, %v396
        %v400 = vlaneseq
        %v401 = vshrl.u32 %v400, 7
        %v402 = vsub.s32 7, %v401
        %v403 = vrot.slane %v391, %v402
        %v404 = vsel %vm268, %v403, %v398
        %v405 = vsel %vm269, %v403, %v399
        %v406 = vsub.f32 %v384, %v393
        %v407 = vsub.f32 %v385, %v395
        %v408 = vsel %vm267, %v406, 0.0
        %v409 = vsel %vm267, %v407, 0.0
        %v410 = vsub.f32 %v384, %v404
        %v411 = vsub.f32 %v385, %v405
        %v412 = vmul.f32 %v408, %v408
        %v413 = vmul.f32 %v409, %v409
        %v414 = vmul.f32 %v410, %v410
        %v415 = vmul.f32 %v411, %v411
        %v416 = vadd.f32 %v412, %v414
        %v417 = vadd.f32 %v413, %v415
        %v418 = vadd.f32 %v381, %v416
        %v419 = vadd.f32 %v382, %v417
        %v420 = vmul.f32 %v418, 0.25
        %v421 = vmul.f32 %v419, 0.25
        %v422 = vadd.f32 %v420, 1e-08
        %v423 = vadd.f32 %v421, 1e-08
        %v424 = vrsqrt.pop %v422
        %v425 = vrsqrt.pop %v423
        %v426 = vmul.f32 %v422, %v424
        %v427 = vmul.f32 %v423, %v425
        %vm428 = vcmp.lt.s32.totalorder %v263, 16
        %v429 = vsel %vm428, %v426, 0.0
        %v430 = vsel %vm428, %v427, 0.0
        %v431 = vadd.f32 %v429, %v430
        %v432 = vld [vmem:[%s247] sm:$0xff]
        %v433 = vadd.f32 %v432, %v431
        %434 = vst [vmem:[%s247] sm:$0xff] %v433
        %s435 = sand.u32 %s119, 1
        %s436 = scalar_lea.sflag [#allocation4], %s435
        %s437 = sand.u32 %s119, 1
        %s438 = smul.addr %s437, 8
        %s439 = scalar_lea.vmem [#allocation7], %s438
        // Predicated region
        $region41: #{tpu_custom_call.1} parent=27 // pred_check
          %p440 = pneg %p129
        $region42: #{tpu_custom_call.1} parent=27 // pred_check_branch
          %442 = sbr.rel (%p440) target = $region44
        $region43: #{tpu_custom_call.1} parent=27 // pred_region
          %s444 = ssub.s32 128, 128
          %445 = vsyncadd %s436, %s444
          %s446 = sadd.s32 %s28, %s27
          %s447 = smul.addr %s446, 128
          %s448 = scalar_lea.hbm %s2, %s447
          %s450 = sshll.u32 %s439, 4
          %s451 = int_to_ptr.vmem [resolvable:$true] %s450
          %453 = dma.vmem_to_hbm [thread:$0]  %s451, 128, %s448, %s436
        $region44: #{tpu_custom_call.1} parent=27 // pred_fallthru
          _
      $region28: #{tpu_custom_call.1} parent=5 // pred_fallthru
        _
      %p454 = scmp.le.s32.totalorder 2, %s17
      // Predicated region
      $region45: #{tpu_custom_call.1} parent=5 // pred_check
        %p455 = pneg %p454
      $region46: #{tpu_custom_call.1} parent=5 // pred_check_branch
        %457 = sbr.rel (%p455) target = $region48
      $region47: #{tpu_custom_call.1} parent=5 // pred_region
        %s458 = ssub.s32 %s17, 2
        // Predicated region
        $region49: #{tpu_custom_call.1} parent=47 // pred_check
          %p459 = pneg %p135
        $region50: #{tpu_custom_call.1} parent=47 // pred_check_branch
          %461 = sbr.rel (%p459) target = $region52
        $region51: #{tpu_custom_call.1} parent=47 // pred_region
          %s462 = sand.u32 %s120, 1
          %s463 = scalar_lea.sflag [#allocation4], %s462
          %s464 = sand.u32 %s120, 1
          %s465 = smul.addr %s464, 8
          %s466 = scalar_lea.vmem [#allocation7], %s465
          %467 = dma.done %s463, 128
        $region52: #{tpu_custom_call.1} parent=47 // pred_fallthru
          _
      $region48: #{tpu_custom_call.1} parent=5 // pred_fallthru
        _
    $region6: #{tpu_custom_call.1} parent=1 // loop_footer
      %s21 = sadd.s32 1, %s17
    $region7: #{tpu_custom_call.1} parent=1 // loop_footer_branch
      %16 = sbr.rel target = $region3
    $region8: #{tpu_custom_call.1} parent=1 // loop_exit
      _
    %468 = vsyncpa [#allocation3], 1
    %s469 = scalar_lea.sflag [#allocation3], 1
    %470 = vsyncpa %s469, 1
    %471 = vsyncpa [#allocation6], 1
    %s472 = scalar_lea.sflag [#allocation6], 1
    %473 = vsyncpa %s472, 1
    %474 = vsyncpa [#allocation4], 1
    %s475 = scalar_lea.sflag [#allocation4], 1
    %476 = vsyncpa %s475, 1

</llo_original>
